<compile_context>
chip_gen: v6e
topology: v6e:2x2x1
jax: 0.10.0
libtpu: 0.0.40
codegen_flags: <defaults>
</compile_context>

<pallas_src>
from collections import namedtuple
from functools import partial

import jax
import jax.numpy as jnp
from jax import lax
from jax.experimental import pallas as pl
from jax.experimental.pallas import tpu as pltpu

TokenPrediction = namedtuple(
    "TokenPrediction",
    ("scores", "aligned_tokens", "attention_scores", "attention_distribution",
     "attention_vector", "decoder_state"),
)

_LANE = 128


def _round_up(x, m):
    return (x + m - 1) // m * m


# ---------------------------------------------------------------------------
# Fused per-decode-step kernel.
#   grid = (n_vocab_tiles,)
#   step 0: attention + state transform -> VMEM scratch + attention outputs
#   every step: intermediate-state @ wvocab tile + bias -> vocab tile
# ---------------------------------------------------------------------------
def _token_predictor_kernel(
    dec_ref,        # (B, D)              f32  decoder states
    keys_ref,       # (L_pad, K_pad)      bf16 precomputed keys'  (zero rows/cols in padding)
    vals_ref,       # (L_pad, K_pad)      bf16 precomputed values'
    wdec_ref,       # (D, K_pad + H_pad)  bf16 packed [Wq | Wst_dec]
    wstc_ref,       # (K_pad, H_pad)      bf16 Wst rows for the attention-context part
    wvocab_ref,     # (1, H_pad, TV)      bf16 contiguous wvocab tile
    bvocab_ref,     # (1, 1, TV)          f32  vocab bias tile
    vocab_out_ref,  # (B, TV)             f32  vocab scores tile
    scores_out_ref, # (B, L_pad)          f32  attention scores
    dist_out_ref,   # (B, L_pad)          f32  attention distribution
    ctx_out_ref,    # (B, K_pad)          f32  attention context vector
    inter_sc,       # scratch (B, H_pad)  bf16 intermediate state (resident across V tiles)
    *, seq_len, k_pad,
):
    @pl.when(pl.program_id(0) == 0)
    def _attention_and_state():
        dec_bf = dec_ref[...].astype(jnp.bfloat16)                       # (B, D)

        # One MXU pass for both the query transform and the decoder half of Wst.
        dec_proj = jnp.dot(dec_bf, wdec_ref[...],
                           preferred_element_type=jnp.float32)           # (B, K_pad + H_pad)
        q_t = dec_proj[:, :k_pad]                                        # (B, K_pad)
        inter_dec = dec_proj[:, k_pad:]                                  # (B, H_pad)

        # scores[b, l] = q'[b, :] . key'[l, :] — contract on K_pad, no explicit transpose.
        scores = lax.dot_general(
            q_t.astype(jnp.bfloat16), keys_ref[...],
            dimension_numbers=(((1,), (1,)), ((), ())),
            preferred_element_type=jnp.float32,
        )                                                                # (B, L_pad)

        # Mask padded key positions.
        col = lax.broadcasted_iota(jnp.int32, scores.shape, 1)
        scores = jnp.where(col < seq_len, scores, -1e30)
        scores_out_ref[...] = scores

        # Numerically stable softmax (f32, exact division per correctness feedback).
        m = jnp.max(scores, axis=-1, keepdims=True)
        e = jnp.exp(scores - m)
        dist = e / jnp.sum(e, axis=-1, keepdims=True)                    # (B, L_pad)
        dist_out_ref[...] = dist

        # Attention context = values' weighted by the distribution.
        ctx = jnp.dot(dist.astype(jnp.bfloat16), vals_ref[...],
                      preferred_element_type=jnp.float32)                # (B, K_pad)
        ctx_out_ref[...] = ctx

        # intermediate = cat([dec, ctx]) @ Wst  (concat folded into a split matmul).
        inter = inter_dec + jnp.dot(ctx.astype(jnp.bfloat16), wstc_ref[...],
                                    preferred_element_type=jnp.float32)  # (B, H_pad)
        # F.dropout(intermediate, 0.0) == identity.  Stored bf16 once; reused by all V tiles.
        inter_sc[...] = inter.astype(jnp.bfloat16)

    # Vocabulary projection for this tile (runs on every grid step).
    vocab_out_ref[...] = (
        jnp.dot(inter_sc[...], wvocab_ref[0], preferred_element_type=jnp.float32)
        + bvocab_ref[0]
    )


# ---------------------------------------------------------------------------
# One-time parameter preprocessing (hoisted out of the per-decode-step path).
# ---------------------------------------------------------------------------
def prepare_params(params, D, K, H, V, tile_v=None):
    """Pad / pack / re-block / cast the parameters into kernel layout once."""
    K_pad = _round_up(K, _LANE)
    H_pad = _round_up(H, _LANE)
    if tile_v is None:
        tile_v = min(2048, _round_up(V, _LANE))
    tile_v = _round_up(tile_v, _LANE)
    v_pad = _round_up(V, tile_v)
    n_tiles = v_pad // tile_v

    wst = params["wst"]
    assert wst.shape[0] == D + K, "in_size mismatch: decoder_state_size + attn value size"

    # Packed decoder-state weight: [Wq | Wst_dec]  (D, K_pad + H_pad), zero-padded columns.
    wq_pad = jnp.zeros((D, K_pad), jnp.float32).at[:, :K].set(params["wq"])
    wst_dec_pad = jnp.zeros((D, H_pad), jnp.float32).at[:, :H].set(wst[:D, :])
    w_dec_packed = jnp.concatenate([wq_pad, wst_dec_pad], axis=1).astype(jnp.bfloat16)

    # Context half of Wst, zero-padded rows (padded ctx lanes are zero) and columns.
    wst_ctx_pad = (jnp.zeros((K_pad, H_pad), jnp.float32)
                   .at[:K, :H].set(wst[D:, :]).astype(jnp.bfloat16))

    # Key/value transforms (pre-transposed, lane-padded) for the one-time encoder prep.
    wkT_pad = (jnp.zeros((K, K_pad), jnp.float32)
               .at[:, :K].set(params["wk"].T).astype(jnp.bfloat16))
    wvT_pad = (jnp.zeros((K, K_pad), jnp.float32)
               .at[:, :K].set(params["wv"].T).astype(jnp.bfloat16))

    # Vocabulary weights: pad rows to H_pad (zero rows contribute nothing) and columns to
    # v_pad, then re-block tile-major so every vocab tile is one contiguous DMA.
    wvocab_pad = jnp.zeros((H_pad, v_pad), jnp.float32).at[:H, :V].set(params["wvocab"])
    wvocab_tiles = (wvocab_pad.reshape(H_pad, n_tiles, tile_v)
                    .transpose(1, 0, 2).astype(jnp.bfloat16))             # (n_tiles, H_pad, TV)

    bvocab_pad = jnp.zeros((v_pad,), jnp.float32).at[:V].set(params["bvocab"])
    bvocab_tiles = bvocab_pad.reshape(n_tiles, 1, tile_v)                 # (n_tiles, 1, TV)

    return {
        "w_dec_packed": w_dec_packed,   # (D, K_pad + H_pad) bf16
        "wst_ctx": wst_ctx_pad,         # (K_pad, H_pad)     bf16
        "wkT_pad": wkT_pad,             # (K, K_pad)         bf16
        "wvT_pad": wvT_pad,             # (K, K_pad)         bf16
        "wvocab_tiles": wvocab_tiles,   # (n_tiles, H_pad, TV) bf16, contiguous per tile
        "bvocab_tiles": bvocab_tiles,   # (n_tiles, 1, TV)   f32
        "d": D, "k": K, "h": H, "v": V,
        "k_pad": K_pad, "h_pad": H_pad, "v_pad": v_pad,
        "tile_v": tile_v, "n_tiles": n_tiles,
    }


# ---------------------------------------------------------------------------
# One-time-per-utterance encoder preprocessing (KV-cache style hoist).
# ---------------------------------------------------------------------------
def prepare_encoder(input_hidden_states, prepared):
    """Compute keys' / values' once per utterance, padded & cast to kernel layout."""
    L, K = input_hidden_states.shape
    assert K == prepared["k"]
    L_pad = _round_up(max(L, _LANE), _LANE)   # lane-dense attention outputs
    hid = jnp.zeros((L_pad, K), jnp.float32).at[:L, :].set(input_hidden_states)
    hid_bf = hid.astype(jnp.bfloat16)
    keys = jnp.dot(hid_bf, prepared["wkT_pad"], preferred_element_type=jnp.float32)
    vals = jnp.dot(hid_bf, prepared["wvT_pad"], preferred_element_type=jnp.float32)
    return {
        "keys": keys.astype(jnp.bfloat16),    # (L_pad, K_pad)
        "vals": vals.astype(jnp.bfloat16),    # (L_pad, K_pad)
        "seq_len": L,
        "l_pad": L_pad,
    }


# ---------------------------------------------------------------------------
# Per-decode-step forward.
# ---------------------------------------------------------------------------
def token_predictor_forward(decoder_state, encoder_cache, prepared, vocab_tokens):
    """decoder_state: (B, D) f32 (batched beam candidates / decode positions; B==1 reproduces
    the torch module).  encoder_cache: output of prepare_encoder (fixed per utterance)."""
    if decoder_state.ndim == 1:
        decoder_state = decoder_state[None, :]
    B, D = decoder_state.shape

    keys, vals = encoder_cache["keys"], encoder_cache["vals"]
    L, L_pad = encoder_cache["seq_len"], encoder_cache["l_pad"]
    K, K_pad = prepared["k"], prepared["k_pad"]
    H_pad = prepared["h_pad"]
    V, v_pad, TV = prepared["v"], prepared["v_pad"], prepared["tile_v"]
    n_tiles = prepared["n_tiles"]

    kernel = partial(_token_predictor_kernel, seq_len=L, k_pad=K_pad)
    full2 = lambda shape: pl.BlockSpec(shape, lambda j: (0, 0))

    vocab_p, attn_scores, attn_dist, ctx = pl.pallas_call(
        kernel,
        out_shape=(
            jax.ShapeDtypeStruct((B, v_pad), jnp.float32),   # vocab scores (padded)
            jax.ShapeDtypeStruct((B, L_pad), jnp.float32),   # attention scores
            jax.ShapeDtypeStruct((B, L_pad), jnp.float32),   # attention distribution
            jax.ShapeDtypeStruct((B, K_pad), jnp.float32),   # attention context vector
        ),
        grid=(n_tiles,),
        in_specs=[
            full2((B, D)),
            full2((L_pad, K_pad)),
            full2((L_pad, K_pad)),
            full2((D, K_pad + H_pad)),
            full2((K_pad, H_pad)),
            pl.BlockSpec((1, H_pad, TV), lambda j: (j, 0, 0)),   # contiguous wvocab tile
            pl.BlockSpec((1, 1, TV), lambda j: (j, 0, 0)),       # contiguous bias tile
        ],
        out_specs=[
            pl.BlockSpec((B, TV), lambda j: (0, j)),
            full2((B, L_pad)),
            full2((B, L_pad)),
            full2((B, K_pad)),
        ],
        scratch_shapes=[pltpu.VMEM((B, H_pad), jnp.bfloat16)],
        # "arbitrary": the step-0 attention/scratch init must see the whole grid on one core.
        # The vocab phase is HBM-bound on wvocab bytes, so one TC saturates HBM even on v7x.
        compiler_params=pltpu.CompilerParams(dimension_semantics=("arbitrary",)),
    )(decoder_state, keys, vals, prepared["w_dec_packed"], prepared["wst_ctx"],
      prepared["wvocab_tiles"], prepared["bvocab_tiles"])

    # torch.t(...) semantics: scores come out (V, B); (V, 1) for B == 1.
    vocab_scores = vocab_p[:, :V]

    return TokenPrediction(
        scores=vocab_scores.T,                              # (V, B)
        aligned_tokens=vocab_tokens,
        attention_scores=attn_scores[:, :L].T,              # (L, B)
        attention_distribution=attn_dist[:, :L].T,          # (L, B)
        attention_vector=ctx[:, :K],                        # (B, K)
        decoder_state=decoder_state,
    )


def init_params(key, D, K, H, V, in_size):
    """Deterministic analog of torch_utils.add_params (uniform init), stored f32."""
    ks = jax.random.split(key, 6)
    u = lambda k, shape: jax.random.uniform(k, shape, jnp.float32, -0.1, 0.1)
    return {
        "wq": u(ks[0], (D, K)),          # attention query transform
        "wk": u(ks[1], (K, K)),          # attention key transform
        "wv": u(ks[2], (K, K)),          # attention value transform
        "wst": u(ks[3], (in_size, H)),   # weights-state-transform_fi
        "wvocab": u(ks[4], (H, V)),      # weights-vocabulary_fi
        "bvocab": u(ks[5], (V,)),        # biases-vocabulary_fi
    }


if __name__ == "__main__":
    # Small shapes analogous to the module:
    #   decoder_state_size D = 32 (torch ~300), attention key/value size K = 32 (torch 250),
    #   seq length L = 8, transform hidden H = 32 (torch 300), vocab V = 128,
    #   B = 8 batched decoder states (beam candidates / decode positions).
    D, K, L, H, V, B = 32, 32, 8, 32, 128, 8
    in_size = D + K

    key = jax.random.PRNGKey(0)
    k_dec, k_hid, k_par = jax.random.split(key, 3)
    decoder_state = jax.random.normal(k_dec, (B, D), jnp.float32)
    input_hidden_states = jax.random.normal(k_hid, (L, K), jnp.float32)
    params = init_params(k_par, D, K, H, V, in_size)

    prepared = prepare_params(params, D, K, H, V)          # one-time layout prep
    enc = prepare_encoder(input_hidden_states, prepared)   # one-time per-utterance KV prep
    vocab_tokens = [f"tok_{i}" for i in range(V)]

    pred = token_predictor_forward(decoder_state, enc, prepared, vocab_tokens)
    jax.block_until_ready(pred.scores)

    # Pure-JAX f32 reference (torch semantics) for a tolerance check (bf16 weights in-kernel).
    q_r = decoder_state @ params["wq"]
    keys_r = input_hidden_states @ params["wk"].T
    vals_r = input_hidden_states @ params["wv"].T
    sc_r = q_r @ keys_r.T
    dist_r = jax.nn.softmax(sc_r, axis=-1)
    ctx_r = dist_r @ vals_r
    inter_r = jnp.concatenate([decoder_state, ctx_r], axis=1) @ params["wst"]
    vocab_r = inter_r @ params["wvocab"] + params["bvocab"][None, :]

    assert pred.scores.shape == (V, B)
    assert pred.attention_scores.shape == (L, B)
    assert pred.attention_distribution.shape == (L, B)
    assert pred.attention_vector.shape == (B, K)
    assert jnp.allclose(jnp.sum(pred.attention_distribution, axis=0), 1.0, atol=1e-3)
    assert jnp.allclose(pred.attention_distribution, dist_r.T, atol=2e-2, rtol=2e-2)
    assert jnp.allclose(pred.attention_vector, ctx_r, atol=3e-2, rtol=3e-2)
    assert jnp.allclose(pred.scores, vocab_r.T, atol=3e-2, rtol=3e-2)
    print("KERNEL_OK")
</pallas_src>

<mosaic_0001>
module attributes {stable_mosaic.version = 11 : i64} {
  func.func @_token_predictor_kernel(%arg0: i32, %arg1: memref<8x32xf32, #tpu.memory_space<vmem>>, %arg2: memref<128x128xbf16, #tpu.memory_space<vmem>>, %arg3: memref<128x128xbf16, #tpu.memory_space<vmem>>, %arg4: memref<32x256xbf16, #tpu.memory_space<vmem>>, %arg5: memref<128x128xbf16, #tpu.memory_space<vmem>>, %arg6: memref<1x128x128xbf16, #tpu.memory_space<vmem>>, %arg7: memref<1x1x128xf32, #tpu.memory_space<vmem>>, %arg8: memref<8x128xf32, #tpu.memory_space<vmem>>, %arg9: memref<8x128xf32, #tpu.memory_space<vmem>>, %arg10: memref<8x128xf32, #tpu.memory_space<vmem>>, %arg11: memref<8x128xf32, #tpu.memory_space<vmem>>, %arg12: memref<8x128xbf16, #tpu.memory_space<vmem>>) attributes {dimension_semantics = [#tpu.dimension_semantics<arbitrary>], iteration_bounds = array<i64: 1>, scalar_prefetch = 0 : i64, scratch_operands = 1 : i64, tpu.core_type = #tpu.core_type<tc>, window_params = [{pipeline_mode = #tpu.pipeline_mode<synchronous>, transform_indices = @transform_0, window_bounds = array<i64: 8, 32>}, {pipeline_mode = #tpu.pipeline_mode<synchronous>, transform_indices = @transform_1, window_bounds = array<i64: 128, 128>}, {pipeline_mode = #tpu.pipeline_mode<synchronous>, transform_indices = @transform_2, window_bounds = array<i64: 128, 128>}, {pipeline_mode = #tpu.pipeline_mode<synchronous>, transform_indices = @transform_3, window_bounds = array<i64: 32, 256>}, {pipeline_mode = #tpu.pipeline_mode<synchronous>, transform_indices = @transform_4, window_bounds = array<i64: 128, 128>}, {transform_indices = @transform_5, window_bounds = array<i64: 1, 128, 128>}, {transform_indices = @transform_6, window_bounds = array<i64: 1, 1, 128>}, {transform_indices = @transform_7, window_bounds = array<i64: 8, 128>}, {pipeline_mode = #tpu.pipeline_mode<synchronous>, transform_indices = @transform_8, window_bounds = array<i64: 8, 128>}, {pipeline_mode = #tpu.pipeline_mode<synchronous>, transform_indices = @transform_9, window_bounds = array<i64: 8, 128>}, {pipeline_mode = #tpu.pipeline_mode<synchronous>, transform_indices = @transform_10, window_bounds = array<i64: 8, 128>}]} {
    %c0_i32 = arith.constant 0 : i32
    %0 = arith.cmpi eq, %arg0, %c0_i32 : i32
    %1 = arith.extui %0 : i1 to i32
    %c0_i32_0 = arith.constant 0 : i32
    %2 = arith.cmpi ne, %1, %c0_i32_0 : i32
    scf.if %2 {
      %c0_10 = arith.constant 0 : index
      %c0_11 = arith.constant 0 : index
      %12 = vector.load %arg1[%c0_10, %c0_11] : memref<8x32xf32, #tpu.memory_space<vmem>>, vector<8x32xf32>
      %13 = arith.truncf %12 : vector<8x32xf32> to vector<8x32xbf16>
      %c0_12 = arith.constant 0 : index
      %c0_13 = arith.constant 0 : index
      %14 = vector.load %arg4[%c0_12, %c0_13] : memref<32x256xbf16, #tpu.memory_space<vmem>>, vector<32x256xbf16>
      %cst_14 = arith.constant dense<0.000000e+00> : vector<8x256xf32>
      %15 = tpu.matmul %13, %14, %cst_14 {dimension_numbers = #tpu.dot_dimension_numbers<[1], [0], [0], [1], [0, 0, 1, 1], [], []>} : vector<8x32xbf16>, vector<32x256xbf16>, vector<8x256xf32> -> vector<8x256xf32>
      %16 = vector.extract_strided_slice %15 {offsets = [0, 0], sizes = [8, 128], strides = [1, 1]} : vector<8x256xf32> to vector<8x128xf32>
      %17 = vector.extract_strided_slice %15 {offsets = [0, 128], sizes = [8, 128], strides = [1, 1]} : vector<8x256xf32> to vector<8x128xf32>
      %18 = arith.truncf %16 : vector<8x128xf32> to vector<8x128xbf16>
      %c0_15 = arith.constant 0 : index
      %c0_16 = arith.constant 0 : index
      %19 = vector.load %arg2[%c0_15, %c0_16] : memref<128x128xbf16, #tpu.memory_space<vmem>>, vector<128x128xbf16>
      %cst_17 = arith.constant dense<0.000000e+00> : vector<8x128xf32>
      %20 = tpu.matmul %18, %19, %cst_17 {dimension_numbers = #tpu.dot_dimension_numbers<[1], [1], [0], [0], [0, 0, 1, 0], [], []>} : vector<8x128xbf16>, vector<128x128xbf16>, vector<8x128xf32> -> vector<8x128xf32>
      %21 = tpu.iota {dimensions = array<i32: 1>} : vector<8x128xi32>
      %c8_i32 = arith.constant 8 : i32
      %22 = vector.broadcast %c8_i32 : i32 to vector<8x128xi32>
      %23 = arith.cmpi slt, %21, %22 : vector<8x128xi32>
      %cst_18 = arith.constant -1.000000e+30 : f32
      %24 = vector.broadcast %cst_18 : f32 to vector<8x128xf32>
      %25 = arith.select %23, %20, %24 : vector<8x128xi1>, vector<8x128xf32>
      %c0_19 = arith.constant 0 : index
      %c0_20 = arith.constant 0 : index
      %26 = vector.load %arg9[%c0_19, %c0_20] : memref<8x128xf32, #tpu.memory_space<vmem>>, vector<8x128xf32>
      tpu.vector_store %arg9[%c0_19, %c0_20], %25 {strides = array<i32>} : memref<8x128xf32, #tpu.memory_space<vmem>>, vector<8x128xf32>,
      %cst_21 = arith.constant dense<0xFF800000> : vector<8xf32>
      %27 = vector.multi_reduction <maximumf>, %25, %cst_21 [1] : vector<8x128xf32> to vector<8xf32>
      %28 = vector.shape_cast %27 : vector<8xf32> to vector<8x1xf32>
      %29 = vector.broadcast %28 : vector<8x1xf32> to vector<8x128xf32>
      %30 = arith.subf %25, %29 : vector<8x128xf32>
      %31 = math.exp %30 : vector<8x128xf32>
      %cst_22 = arith.constant dense<0.000000e+00> : vector<8xf32>
      %32 = vector.multi_reduction <add>, %31, %cst_22 [1] : vector<8x128xf32> to vector<8xf32>
      %33 = vector.shape_cast %32 : vector<8xf32> to vector<8x1xf32>
      %34 = vector.broadcast %33 : vector<8x1xf32> to vector<8x128xf32>
      %35 = arith.divf %31, %34 : vector<8x128xf32>
      %c0_23 = arith.constant 0 : index
      %c0_24 = arith.constant 0 : index
      %36 = vector.load %arg10[%c0_23, %c0_24] : memref<8x128xf32, #tpu.memory_space<vmem>>, vector<8x128xf32>
      tpu.vector_store %arg10[%c0_23, %c0_24], %35 {strides = array<i32>} : memref<8x128xf32, #tpu.memory_space<vmem>>, vector<8x128xf32>,
      %37 = arith.truncf %35 : vector<8x128xf32> to vector<8x128xbf16>
      %c0_25 = arith.constant 0 : index
      %c0_26 = arith.constant 0 : index
      %38 = vector.load %arg3[%c0_25, %c0_26] : memref<128x128xbf16, #tpu.memory_space<vmem>>, vector<128x128xbf16>
      %cst_27 = arith.constant dense<0.000000e+00> : vector<8x128xf32>
      %39 = tpu.matmul %37, %38, %cst_27 {dimension_numbers = #tpu.dot_dimension_numbers<[1], [0], [0], [1], [0, 0, 1, 1], [], []>} : vector<8x128xbf16>, vector<128x128xbf16>, vector<8x128xf32> -> vector<8x128xf32>
      %c0_28 = arith.constant 0 : index
      %c0_29 = arith.constant 0 : index
      %40 = vector.load %arg11[%c0_28, %c0_29] : memref<8x128xf32, #tpu.memory_space<vmem>>, vector<8x128xf32>
      tpu.vector_store %arg11[%c0_28, %c0_29], %39 {strides = array<i32>} : memref<8x128xf32, #tpu.memory_space<vmem>>, vector<8x128xf32>,
      %41 = arith.truncf %39 : vector<8x128xf32> to vector<8x128xbf16>
      %c0_30 = arith.constant 0 : index
      %c0_31 = arith.constant 0 : index
      %42 = vector.load %arg5[%c0_30, %c0_31] : memref<128x128xbf16, #tpu.memory_space<vmem>>, vector<128x128xbf16>
      %cst_32 = arith.constant dense<0.000000e+00> : vector<8x128xf32>
      %43 = tpu.matmul %41, %42, %cst_32 {dimension_numbers = #tpu.dot_dimension_numbers<[1], [0], [0], [1], [0, 0, 1, 1], [], []>} : vector<8x128xbf16>, vector<128x128xbf16>, vector<8x128xf32> -> vector<8x128xf32>
      %44 = arith.addf %17, %43 : vector<8x128xf32>
      %45 = arith.truncf %44 : vector<8x128xf32> to vector<8x128xbf16>
      %c0_33 = arith.constant 0 : index
      %c0_34 = arith.constant 0 : index
      %46 = vector.load %arg12[%c0_33, %c0_34] : memref<8x128xbf16, #tpu.memory_space<vmem>>, vector<8x128xbf16>
      tpu.vector_store %arg12[%c0_33, %c0_34], %45 {strides = array<i32>} : memref<8x128xbf16, #tpu.memory_space<vmem>>, vector<8x128xbf16>,
    } else {
    }
    %c0 = arith.constant 0 : index
    %c0_1 = arith.constant 0 : index
    %3 = vector.load %arg12[%c0, %c0_1] : memref<8x128xbf16, #tpu.memory_space<vmem>>, vector<8x128xbf16>
    %c0_2 = arith.constant 0 : index
    %c0_3 = arith.constant 0 : index
    %c0_4 = arith.constant 0 : index
    %4 = vector.load %arg6[%c0_2, %c0_3, %c0_4] : memref<1x128x128xbf16, #tpu.memory_space<vmem>>, vector<1x128x128xbf16>
    %5 = vector.shape_cast %4 : vector<1x128x128xbf16> to vector<128x128xbf16>
    %cst = arith.constant dense<0.000000e+00> : vector<8x128xf32>
    %6 = tpu.matmul %3, %5, %cst {dimension_numbers = #tpu.dot_dimension_numbers<[1], [0], [0], [1], [0, 0, 1, 1], [], []>} : vector<8x128xbf16>, vector<128x128xbf16>, vector<8x128xf32> -> vector<8x128xf32>
    %c0_5 = arith.constant 0 : index
    %c0_6 = arith.constant 0 : index
    %c0_7 = arith.constant 0 : index
    %7 = vector.load %arg7[%c0_5, %c0_6, %c0_7] : memref<1x1x128xf32, #tpu.memory_space<vmem>>, vector<1x1x128xf32>
    %8 = vector.shape_cast %7 : vector<1x1x128xf32> to vector<1x128xf32>
    %9 = vector.broadcast %8 : vector<1x128xf32> to vector<8x128xf32>
    %10 = arith.addf %6, %9 : vector<8x128xf32>
    %c0_8 = arith.constant 0 : index
    %c0_9 = arith.constant 0 : index
    %11 = vector.load %arg8[%c0_8, %c0_9] : memref<8x128xf32, #tpu.memory_space<vmem>>, vector<8x128xf32>
    tpu.vector_store %arg8[%c0_8, %c0_9], %10 {strides = array<i32>} : memref<8x128xf32, #tpu.memory_space<vmem>>, vector<8x128xf32>,
    return
  }
  func.func @transform_0(%arg0: i32) -> (i32, i32) {
    %c0_i32 = arith.constant 0 : i32
    %c0_i32_0 = arith.constant 0 : i32
    %c0_i32_1 = arith.constant 0 : i32
    return %c0_i32, %c0_i32_0 : i32, i32
  }
  func.func @transform_1(%arg0: i32) -> (i32, i32) {
    %c0_i32 = arith.constant 0 : i32
    %c0_i32_0 = arith.constant 0 : i32
    %c0_i32_1 = arith.constant 0 : i32
    return %c0_i32, %c0_i32_0 : i32, i32
  }
  func.func @transform_2(%arg0: i32) -> (i32, i32) {
    %c0_i32 = arith.constant 0 : i32
    %c0_i32_0 = arith.constant 0 : i32
    %c0_i32_1 = arith.constant 0 : i32
    return %c0_i32, %c0_i32_0 : i32, i32
  }
  func.func @transform_3(%arg0: i32) -> (i32, i32) {
    %c0_i32 = arith.constant 0 : i32
    %c0_i32_0 = arith.constant 0 : i32
    %c0_i32_1 = arith.constant 0 : i32
    return %c0_i32, %c0_i32_0 : i32, i32
  }
  func.func @transform_4(%arg0: i32) -> (i32, i32) {
    %c0_i32 = arith.constant 0 : i32
    %c0_i32_0 = arith.constant 0 : i32
    %c0_i32_1 = arith.constant 0 : i32
    return %c0_i32, %c0_i32_0 : i32, i32
  }
  func.func @transform_5(%arg0: i32) -> (i32, i32, i32) {
    %c0_i32 = arith.constant 0 : i32
    %c0_i32_0 = arith.constant 0 : i32
    %c0_i32_1 = arith.constant 0 : i32
    return %arg0, %c0_i32, %c0_i32_0 : i32, i32, i32
  }
  func.func @transform_6(%arg0: i32) -> (i32, i32, i32) {
    %c0_i32 = arith.constant 0 : i32
    %c0_i32_0 = arith.constant 0 : i32
    %c0_i32_1 = arith.constant 0 : i32
    return %arg0, %c0_i32, %c0_i32_0 : i32, i32, i32
  }
  func.func @transform_7(%arg0: i32) -> (i32, i32) {
    %c0_i32 = arith.constant 0 : i32
    %c0_i32_0 = arith.constant 0 : i32
    return %c0_i32, %arg0 : i32, i32
  }
  func.func @transform_8(%arg0: i32) -> (i32, i32) {
    %c0_i32 = arith.constant 0 : i32
    %c0_i32_0 = arith.constant 0 : i32
    %c0_i32_1 = arith.constant 0 : i32
    return %c0_i32, %c0_i32_0 : i32, i32
  }
  func.func @transform_9(%arg0: i32) -> (i32, i32) {
    %c0_i32 = arith.constant 0 : i32
    %c0_i32_0 = arith.constant 0 : i32
    %c0_i32_1 = arith.constant 0 : i32
    return %c0_i32, %c0_i32_0 : i32, i32
  }
  func.func @transform_10(%arg0: i32) -> (i32, i32) {
    %c0_i32 = arith.constant 0 : i32
    %c0_i32_0 = arith.constant 0 : i32
    %c0_i32_1 = arith.constant 0 : i32
    return %c0_i32, %c0_i32_0 : i32, i32
  }
}

</mosaic_0001>

<llo_original>
// kernel: tpu_custom_call.1
$region0: #{tpu_custom_call.1}
  #allocation0 [shape = 'u32[]', space=smem, size = 0x4, offset = 0x4, fixed_abs, tag = 'smem constant byte address 0x4 - core index']
  #allocation1 [shape = 'u32[144,128]{1,0:T(1,128)}', space=vmem, size = 0x12000, scoped, tag = 'internal scratch']
  #allocation2 [shape = 'bf16[8,128]{1,0:T(8,128)(2,1)}', space=vmem, size = 0x800, scoped, tag = 'scratch operand']
  %s0 = inlined_call_operand.hbm [shape: f32[8,32], index: 0, kind: input, shape index: {}]
  %s1 = inlined_call_operand.hbm [shape: bf16[128,128], index: 1, kind: input, shape index: {}]
  %s2 = inlined_call_operand.hbm [shape: bf16[128,128], index: 2, kind: input, shape index: {}]
  %s3 = inlined_call_operand.hbm [shape: bf16[32,256], index: 3, kind: input, shape index: {}]
  %s4 = inlined_call_operand.hbm [shape: bf16[128,128], index: 4, kind: input, shape index: {}]
  %s5 = inlined_call_operand.hbm [shape: bf16[1,128,128], index: 5, kind: input, shape index: {}]
  %s6 = inlined_call_operand.vmem [shape: f32[1,1,128], index: 6, kind: input, shape index: {}]
  %s7 = inlined_call_operand.hbm [shape: f32[8,128], index: 7, kind: output, shape index: {0}]
  %s8 = inlined_call_operand.hbm [shape: f32[8,128], index: 8, kind: output, shape index: {1}]
  %s9 = inlined_call_operand.hbm [shape: f32[8,128], index: 9, kind: output, shape index: {2}]
  %s10 = inlined_call_operand.hbm [shape: f32[8,128], index: 10, kind: output, shape index: {3}]
  %11 = xla_tuple %s7, %s8, %s9, %s10
  %s12 = sld [smem:[#allocation0]]
  $region90: #{tpu_custom_call.1} parent=0
    _
  %s14 = ssub.s32 1, %s12
  %s15 = scalar_select 0, %s14, %s12
  $region1: #{tpu_custom_call.1} parent=0
    #allocation3 [shape = 'u8[4096]{0}', space=vmem, size = 0x1000, scoped, tag = 'input window, operand 0, single buffered']
    #allocation4 [shape = 's32[1]{0}', space=sflag, size = 0x4, scoped, tag = 'scoped memory for tpu_custom_call.1']
    #allocation5 [shape = 's32[1]{0}', space=sflag, size = 0x4, scoped, tag = 'scoped memory for tpu_custom_call.1']
    #allocation6 [shape = 'u8[32768]{0}', space=vmem, size = 0x8000, scoped, tag = 'input window, operand 1, single buffered']
    #allocation7 [shape = 's32[1]{0}', space=sflag, size = 0x4, scoped, tag = 'scoped memory for tpu_custom_call.1']
    #allocation8 [shape = 'u8[32768]{0}', space=vmem, size = 0x8000, scoped, tag = 'input window, operand 2, single buffered']
    #allocation9 [shape = 'u8[16384]{0}', space=vmem, size = 0x4000, scoped, tag = 'input window, operand 3, single buffered']
    #allocation10 [shape = 's32[1]{0}', space=sflag, size = 0x4, scoped, tag = 'scoped memory for tpu_custom_call.1']
    #allocation11 [shape = 'u8[32768]{0}', space=vmem, size = 0x8000, scoped, tag = 'input window, operand 4, single buffered']
    #allocation12 [shape = 'u8[32768]{0}', space=vmem, size = 0x8000, scoped, tag = 'input window, operand 5, single buffered']
    #allocation13 [shape = 's32[1]{0}', space=sflag, size = 0x4, scoped, tag = 'scoped memory for tpu_custom_call.1']
    #allocation14 [shape = 'u8[4096]{0}', space=vmem, size = 0x1000, scoped, tag = 'output window, operand 0, single buffered']
    #allocation15 [shape = 'u8[4096]{0}', space=vmem, size = 0x1000, scoped, tag = 'output window, operand 1, single buffered']
    #allocation16 [shape = 's32[1]{0}', space=sflag, size = 0x4, scoped, tag = 'scoped memory for tpu_custom_call.1']
    #allocation17 [shape = 'u8[4096]{0}', space=vmem, size = 0x1000, scoped, tag = 'output window, operand 2, single buffered']
    #allocation18 [shape = 'u8[4096]{0}', space=vmem, size = 0x1000, scoped, tag = 'output window, operand 3, single buffered']
    #allocation19 [shape = 's32[1]{0}', space=sflag, size = 0x4, scoped, tag = 'scoped memory for tpu_custom_call.1']
    %16 = vsyncpa [#allocation4], 0
    %17 = vsyncpa [#allocation7], 0
    %18 = vsyncpa [#allocation10], 0
    %19 = vsyncpa [#allocation13], 0
    %20 = vsyncpa [#allocation5], 0
    %21 = vsyncpa [#allocation16], 0
    %22 = vsyncpa [#allocation19], 0
    // Predicated region
    $region2: #{tpu_custom_call.1} parent=1 // pred_check
      _
    $region3: #{tpu_custom_call.1} parent=1 // pred_check_branch
      %24 = sbr.rel (0) target = $region5
    $region4: #{tpu_custom_call.1} parent=1 // pred_region
      %s26 = ssub.s32 128, 128
      %27 = vsyncadd [#allocation4], %s26
      %s29 = sshll.u32 [#allocation3], 4
      %s30 = int_to_ptr.vmem [resolvable:$true] %s29
      %32 = dma.hbm_to_vmem [thread:$0]  %s0, 128, %s30, [#allocation4]
    $region5: #{tpu_custom_call.1} parent=1 // pred_fallthru
      _
    // Predicated region
    $region6: #{tpu_custom_call.1} parent=1 // pred_check
      _
    $region7: #{tpu_custom_call.1} parent=1 // pred_check_branch
      %34 = sbr.rel (0) target = $region9
    $region8: #{tpu_custom_call.1} parent=1 // pred_region
      %s36 = ssub.s32 1024, 1024
      %37 = vsyncadd [#allocation7], %s36
      %s38 = sshll.u32 [#allocation6], 4
      %s39 = int_to_ptr.vmem [resolvable:$true] %s38
      %44 = dma.hbm_to_vmem [thread:$0]  %s1, 1024, %s39, [#allocation7], 64, 64, 4
    $region9: #{tpu_custom_call.1} parent=1 // pred_fallthru
      _
    // Predicated region
    $region10: #{tpu_custom_call.1} parent=1 // pred_check
      _
    $region11: #{tpu_custom_call.1} parent=1 // pred_check_branch
      %46 = sbr.rel (0) target = $region13
    $region12: #{tpu_custom_call.1} parent=1 // pred_region
      %s48 = ssub.s32 1024, 1024
      %49 = vsyncadd [#allocation7], %s48
      %s50 = sshll.u32 [#allocation8], 4
      %s51 = int_to_ptr.vmem [resolvable:$true] %s50
      %56 = dma.hbm_to_vmem [thread:$0]  %s2, 1024, %s51, [#allocation7], 64, 64, 4
    $region13: #{tpu_custom_call.1} parent=1 // pred_fallthru
      _
    // Predicated region
    $region14: #{tpu_custom_call.1} parent=1 // pred_check
      _
    $region15: #{tpu_custom_call.1} parent=1 // pred_check_branch
      %58 = sbr.rel (0) target = $region17
    $region16: #{tpu_custom_call.1} parent=1 // pred_region
      %s60 = ssub.s32 512, 512
      %61 = vsyncadd [#allocation10], %s60
      %s62 = sshll.u32 [#allocation9], 4
      %s63 = int_to_ptr.vmem [resolvable:$true] %s62
      %68 = dma.hbm_to_vmem [thread:$0]  %s3, 512, %s63, [#allocation10], 128, 128, 8
    $region17: #{tpu_custom_call.1} parent=1 // pred_fallthru
      _
    // Predicated region
    $region18: #{tpu_custom_call.1} parent=1 // pred_check
      _
    $region19: #{tpu_custom_call.1} parent=1 // pred_check_branch
      %70 = sbr.rel (0) target = $region21
    $region20: #{tpu_custom_call.1} parent=1 // pred_region
      %s72 = ssub.s32 1024, 1024
      %73 = vsyncadd [#allocation10], %s72
      %s74 = sshll.u32 [#allocation11], 4
      %s75 = int_to_ptr.vmem [resolvable:$true] %s74
      %80 = dma.hbm_to_vmem [thread:$0]  %s4, 1024, %s75, [#allocation10], 64, 64, 4
    $region21: #{tpu_custom_call.1} parent=1 // pred_fallthru
      _
    // Predicated region
    $region22: #{tpu_custom_call.1} parent=1 // pred_check
      _
    $region23: #{tpu_custom_call.1} parent=1 // pred_check_branch
      %82 = sbr.rel (0) target = $region25
    $region24: #{tpu_custom_call.1} parent=1 // pred_region
      %s84 = ssub.s32 1024, 1024
      %85 = vsyncadd [#allocation13], %s84
      %s86 = sshll.u32 [#allocation12], 4
      %s87 = int_to_ptr.vmem [resolvable:$true] %s86
      %92 = dma.hbm_to_vmem [thread:$0]  %s5, 1024, %s87, [#allocation13], 64, 64, 4
    $region25: #{tpu_custom_call.1} parent=1 // pred_fallthru
      _
    // Predicated region
    $region26: #{tpu_custom_call.1} parent=1 // pred_check
      _
    $region27: #{tpu_custom_call.1} parent=1 // pred_check_branch
      %94 = sbr.rel (0) target = $region29
    $region28: #{tpu_custom_call.1} parent=1 // pred_region
      _
    $region29: #{tpu_custom_call.1} parent=1 // pred_fallthru
      _
    // Predicated region
    $region30: #{tpu_custom_call.1} parent=1 // pred_check
      _
    $region31: #{tpu_custom_call.1} parent=1 // pred_check_branch
      %96 = sbr.rel (0) target = $region33
    $region32: #{tpu_custom_call.1} parent=1 // pred_region
      %97 = dma.done [#allocation4], 128
    $region33: #{tpu_custom_call.1} parent=1 // pred_fallthru
      _
    // Predicated region
    $region34: #{tpu_custom_call.1} parent=1 // pred_check
      _
    $region35: #{tpu_custom_call.1} parent=1 // pred_check_branch
      %99 = sbr.rel (0) target = $region37
    $region36: #{tpu_custom_call.1} parent=1 // pred_region
      %100 = dma.done [#allocation7], 1024
    $region37: #{tpu_custom_call.1} parent=1 // pred_fallthru
      _
    // Predicated region
    $region38: #{tpu_custom_call.1} parent=1 // pred_check
      _
    $region39: #{tpu_custom_call.1} parent=1 // pred_check_branch
      %102 = sbr.rel (0) target = $region41
    $region40: #{tpu_custom_call.1} parent=1 // pred_region
      %103 = dma.done [#allocation7], 1024
    $region41: #{tpu_custom_call.1} parent=1 // pred_fallthru
      _
    // Predicated region
    $region42: #{tpu_custom_call.1} parent=1 // pred_check
      _
    $region43: #{tpu_custom_call.1} parent=1 // pred_check_branch
      %105 = sbr.rel (0) target = $region45
    $region44: #{tpu_custom_call.1} parent=1 // pred_region
      %106 = dma.done [#allocation10], 512
    $region45: #{tpu_custom_call.1} parent=1 // pred_fallthru
      _
    // Predicated region
    $region46: #{tpu_custom_call.1} parent=1 // pred_check
      _
    $region47: #{tpu_custom_call.1} parent=1 // pred_check_branch
      %108 = sbr.rel (0) target = $region49
    $region48: #{tpu_custom_call.1} parent=1 // pred_region
      %109 = dma.done [#allocation10], 1024
    $region49: #{tpu_custom_call.1} parent=1 // pred_fallthru
      _
    // Predicated region
    $region50: #{tpu_custom_call.1} parent=1 // pred_check
      _
    $region51: #{tpu_custom_call.1} parent=1 // pred_check_branch
      %111 = sbr.rel (0) target = $region53
    $region52: #{tpu_custom_call.1} parent=1 // pred_region
      %112 = dma.done [#allocation13], 1024
    $region53: #{tpu_custom_call.1} parent=1 // pred_fallthru
      _
    %p114 = scmp.eq.s32.totalorder 0, 0
    // Predicated region
    $region54: #{tpu_custom_call.1} parent=1 // pred_check
      %p115 = pneg %p114
    $region55: #{tpu_custom_call.1} parent=1 // pred_check_branch
      %117 = sbr.rel (%p115) target = $region57
    $region56: #{tpu_custom_call.1} parent=1 // pred_region
      %v118 = vld [vmem:[#allocation3] sm:$0xff]
      %v119 = vpack.c.bf16 %v118, %v118
      %v120 = vld [vmem:[#allocation9] sm:$0xff]
      %v121 = vld [vmem:[#allocation9 + $0x8] sm:$0xff]
      %v122 = vld [vmem:[#allocation9 + $0x10] sm:$0xff]
      %v123 = vld [vmem:[#allocation9 + $0x18] sm:$0xff]
      %v128 = vunpack.c.l.b16 %v120
      %v129 = vunpack.c.h.b16 %v120
      %v130 = vunpack.c.l.b16 %v121
      %v131 = vunpack.c.h.b16 %v121
      %v132 = vunpack.c.l.b16 %v122
      %v133 = vunpack.c.h.b16 %v122
      %v134 = vunpack.c.l.b16 %v123
      %v135 = vunpack.c.h.b16 %v123
      %v136 = vpack.c.b16 %v130, %v128
      %v137 = vpack.c.b16 %v131, %v129
      %v138 = vpack.c.b16 %v134, %v132
      %v139 = vpack.c.b16 %v135, %v133
      %vm144 = vcmask 261120
      %v146 = vsel %vm144, %v119, 0
      %148 = vmatprep.subr.bf16.mxu0 0
      %149 = vmatpush1.bf16.msra.mxu0 0
      %150 = vmatprep.subr.bf16.mxu0 0
      %151 = vmatpush1.bf16.msra.mxu0 0
      %152 = vmatprep.subr.bf16.mxu0 0
      %153 = vmatpush1.bf16.msra.mxu0 0
      %154 = vmatprep.subr.bf16.mxu0 0
      %155 = vmatpush1.bf16.msra.mxu0 0
      %156 = vmatprep.subr.bf16.mxu0 0
      %157 = vmatpush1.bf16.msra.mxu0 0
      %158 = vmatprep.subr.bf16.mxu0 0
      %159 = vmatpush1.bf16.msra.mxu0 0
      %160 = vmatprep.subr.bf16.mxu0 %v139
      %161 = vmatpush1.bf16.msra.mxu0 %v138
      %162 = vmatprep.subr.bf16.mxu0 %v137
      %163 = vmatpush1.bf16.msra.mxu0 %v136
      %164 = vmatprep.subr.bf16.mxu0 0
      %165 = vmatpush2.bf16.msra.mxu0 0
      %166 = vmatprep.subr.bf16.mxu0 0
      %167 = vmatpush2.bf16.msra.mxu0 0
      %168 = vmatprep.subr.bf16.mxu0 0
      %169 = vmatpush2.bf16.msra.mxu0 0
      %170 = vmatprep.subr.bf16.mxu0 0
      %171 = vmatpush2.bf16.msra.mxu0 0
      %172 = vmatprep.subr.bf16.mxu0 0
      %173 = vmatpush2.bf16.msra.mxu0 0
      %174 = vmatprep.subr.bf16.mxu0 0
      %175 = vmatpush2.bf16.msra.mxu0 0
      %176 = vmatprep.subr.bf16.mxu0 0
      %177 = vmatpush2.bf16.msra.mxu0 0
      %178 = vmatprep.subr.bf16.mxu0 0
      %179 = vmatpush2.bf16.msra.mxu0 0
      %180 = vmatprep.mubr.bf16.mxu0 0
      %181 = vmatmul.mubr.bf16.gmra.mxu0 %v146
      %v182 = vpop.f32.mrf.mxu0
      %v183 = vadd.f32 0.0, %v182
      %v184 = vpop.f32.mrf.mxu0
      %v185 = vadd.f32 0.0, %v184
      %v186 = vpop.f32.mrf.mxu0
      %v187 = vpop.f32.mrf.mxu0
      %188 = vdwg.mxu0
      %v189 = vpack.c.bf16 %v183, %v183
      %v190 = vld [vmem:[#allocation6] sm:$0xf]
      %v191 = vld [vmem:[#allocation6 + $0x4] sm:$0xf]
      %v192 = vld [vmem:[#allocation6 + $0x8] sm:$0xf]
      %v193 = vld [vmem:[#allocation6 + $0xc] sm:$0xf]
      %v194 = vld [vmem:[#allocation6 + $0x10] sm:$0xf]
      %v195 = vld [vmem:[#allocation6 + $0x14] sm:$0xf]
      %v196 = vld [vmem:[#allocation6 + $0x18] sm:$0xf]
      %v197 = vld [vmem:[#allocation6 + $0x1c] sm:$0xf]
      %v198 = vld [vmem:[#allocation6 + $0x20] sm:$0xf]
      %v199 = vld [vmem:[#allocation6 + $0x24] sm:$0xf]
      %v200 = vld [vmem:[#allocation6 + $0x28] sm:$0xf]
      %v201 = vld [vmem:[#allocation6 + $0x2c] sm:$0xf]
      %v202 = vld [vmem:[#allocation6 + $0x30] sm:$0xf]
      %v203 = vld [vmem:[#allocation6 + $0x34] sm:$0xf]
      %v204 = vld [vmem:[#allocation6 + $0x38] sm:$0xf]
      %v205 = vld [vmem:[#allocation6 + $0x3c] sm:$0xf]
      %v222 = vunpack.c.l.b16 %v190
      %v223 = vunpack.c.l.b16 %v191
      %v224 = vunpack.c.l.b16 %v192
      %v225 = vunpack.c.l.b16 %v193
      %v226 = vunpack.c.l.b16 %v194
      %v227 = vunpack.c.l.b16 %v195
      %v228 = vunpack.c.l.b16 %v196
      %v229 = vunpack.c.l.b16 %v197
      %v230 = vunpack.c.l.b16 %v198
      %v231 = vunpack.c.l.b16 %v199
      %v232 = vunpack.c.l.b16 %v200
      %v233 = vunpack.c.l.b16 %v201
      %v234 = vunpack.c.l.b16 %v202
      %v235 = vunpack.c.l.b16 %v203
      %v236 = vunpack.c.l.b16 %v204
      %v237 = vunpack.c.l.b16 %v205
      %v238 = vpack.c.b16 %v223, %v222
      %v239 = vpack.c.b16 %v225, %v224
      %v240 = vpack.c.b16 %v227, %v226
      %v241 = vpack.c.b16 %v229, %v228
      %v242 = vpack.c.b16 %v231, %v230
      %v243 = vpack.c.b16 %v233, %v232
      %v244 = vpack.c.b16 %v235, %v234
      %v245 = vpack.c.b16 %v237, %v236
      %254 = vmatprep.subr.bf16.mxu0 0
      %255 = vmatpush1.bf16.xpose.msra.mxu0 %v245
      %256 = vmatprep.subr.bf16.mxu0 0
      %257 = vmatpush1.bf16.xpose.msra.mxu0 %v244
      %258 = vmatprep.subr.bf16.mxu0 0
      %259 = vmatpush1.bf16.xpose.msra.mxu0 %v243
      %260 = vmatprep.subr.bf16.mxu0 0
      %261 = vmatpush1.bf16.xpose.msra.mxu0 %v242
      %262 = vmatprep.subr.bf16.mxu0 0
      %263 = vmatpush1.bf16.xpose.msra.mxu0 %v241
      %264 = vmatprep.subr.bf16.mxu0 0
      %265 = vmatpush1.bf16.xpose.msra.mxu0 %v240
      %266 = vmatprep.subr.bf16.mxu0 0
      %267 = vmatpush1.bf16.xpose.msra.mxu0 %v239
      %268 = vmatprep.subr.bf16.mxu0 0
      %269 = vmatpush1.bf16.xpose.msra.mxu0 %v238
      %270 = vmatprep.subr.bf16.mxu0 0
      %271 = vmatpush2.bf16.xpose.msra.mxu0 0
      %272 = vmatprep.subr.bf16.mxu0 0
      %273 = vmatpush2.bf16.xpose.msra.mxu0 0
      %274 = vmatprep.subr.bf16.mxu0 0
      %275 = vmatpush2.bf16.xpose.msra.mxu0 0
      %276 = vmatprep.subr.bf16.mxu0 0
      %277 = vmatpush2.bf16.xpose.msra.mxu0 0
      %278 = vmatprep.subr.bf16.mxu0 0
      %279 = vmatpush2.bf16.xpose.msra.mxu0 0
      %280 = vmatprep.subr.bf16.mxu0 0
      %281 = vmatpush2.bf16.xpose.msra.mxu0 0
      %282 = vmatprep.subr.bf16.mxu0 0
      %283 = vmatpush2.bf16.xpose.msra.mxu0 0
      %284 = vmatprep.subr.bf16.mxu0 0
      %285 = vmatpush2.bf16.xpose.msra.mxu0 0
      %286 = vmatprep.mubr.bf16.mxu0 0
      %287 = vmatmul.mubr.bf16.gmra.mxu0 %v189
      %v288 = vpop.f32.mrf.mxu0
      %v289 = vadd.f32 0.0, %v288
      %v290 = vpop.f32.mrf.mxu0
      %v291 = vpop.f32.mrf.mxu0
      %v292 = vpop.f32.mrf.mxu0
      %293 = vdwg.mxu0
      %v294 = vlaneseq
      %v295 = vand.u32 %v294, 127
      %vm296 = vcmp.lt.s32.totalorder %v295, 8
      %v297 = vsel %vm296, %v289, -1e+30
      %298 = vst [vmem:[#allocation15] sm:$0xff] %v297
      %299 = vmax.xlane.f32.xlu0 %v297
      %v300 = vpop.xlane.xlu0 %299
      %v301 = vsub.f32 %v297, %v300
      %v302 = vmul.f32 %v301, 1.442695
      %v303 = vpow.pop %v302
      %304 = vadd.xlane.f32.xlu0 %v303
      %v305 = vpop.xlane.xlu0 %304
      %v306 = vrcp.pop %v305
      %v307 = vmul.f32 %v303, %v306
      %308 = vst [vmem:[#allocation17] sm:$0xff] %v307
      %v309 = vpack.c.bf16 %v307, %v307
      %v310 = vld [vmem:[#allocation8] sm:$0xf]
      %v311 = vld [vmem:[#allocation8 + $0x4] sm:$0xf]
      %v312 = vld [vmem:[#allocation8 + $0x8] sm:$0xf]
      %v313 = vld [vmem:[#allocation8 + $0xc] sm:$0xf]
      %v314 = vld [vmem:[#allocation8 + $0x10] sm:$0xf]
      %v315 = vld [vmem:[#allocation8 + $0x14] sm:$0xf]
      %v316 = vld [vmem:[#allocation8 + $0x18] sm:$0xf]
      %v317 = vld [vmem:[#allocation8 + $0x1c] sm:$0xf]
      %v318 = vld [vmem:[#allocation8 + $0x20] sm:$0xf]
      %v319 = vld [vmem:[#allocation8 + $0x24] sm:$0xf]
      %v320 = vld [vmem:[#allocation8 + $0x28] sm:$0xf]
      %v321 = vld [vmem:[#allocation8 + $0x2c] sm:$0xf]
      %v322 = vld [vmem:[#allocation8 + $0x30] sm:$0xf]
      %v323 = vld [vmem:[#allocation8 + $0x34] sm:$0xf]
      %v324 = vld [vmem:[#allocation8 + $0x38] sm:$0xf]
      %v325 = vld [vmem:[#allocation8 + $0x3c] sm:$0xf]
      %v342 = vunpack.c.l.b16 %v310
      %v343 = vunpack.c.l.b16 %v311
      %v344 = vunpack.c.l.b16 %v312
      %v345 = vunpack.c.l.b16 %v313
      %v346 = vunpack.c.l.b16 %v314
      %v347 = vunpack.c.l.b16 %v315
      %v348 = vunpack.c.l.b16 %v316
      %v349 = vunpack.c.l.b16 %v317
      %v350 = vunpack.c.l.b16 %v318
      %v351 = vunpack.c.l.b16 %v319
      %v352 = vunpack.c.l.b16 %v320
      %v353 = vunpack.c.l.b16 %v321
      %v354 = vunpack.c.l.b16 %v322
      %v355 = vunpack.c.l.b16 %v323
      %v356 = vunpack.c.l.b16 %v324
      %v357 = vunpack.c.l.b16 %v325
      %v358 = vpack.c.b16 %v343, %v342
      %v359 = vpack.c.b16 %v345, %v344
      %v360 = vpack.c.b16 %v347, %v346
      %v361 = vpack.c.b16 %v349, %v348
      %v362 = vpack.c.b16 %v351, %v350
      %v363 = vpack.c.b16 %v353, %v352
      %v364 = vpack.c.b16 %v355, %v354
      %v365 = vpack.c.b16 %v357, %v356
      %374 = vmatprep.subr.bf16.mxu0 0
      %375 = vmatpush1.bf16.msra.mxu0 %v365
      %376 = vmatprep.subr.bf16.mxu0 0
      %377 = vmatpush1.bf16.msra.mxu0 %v364
      %378 = vmatprep.subr.bf16.mxu0 0
      %379 = vmatpush1.bf16.msra.mxu0 %v363
      %380 = vmatprep.subr.bf16.mxu0 0
      %381 = vmatpush1.bf16.msra.mxu0 %v362
      %382 = vmatprep.subr.bf16.mxu0 0
      %383 = vmatpush1.bf16.msra.mxu0 %v361
      %384 = vmatprep.subr.bf16.mxu0 0
      %385 = vmatpush1.bf16.msra.mxu0 %v360
      %386 = vmatprep.subr.bf16.mxu0 0
      %387 = vmatpush1.bf16.msra.mxu0 %v359
      %388 = vmatprep.subr.bf16.mxu0 0
      %389 = vmatpush1.bf16.msra.mxu0 %v358
      %390 = vmatprep.subr.bf16.mxu0 0
      %391 = vmatpush2.bf16.msra.mxu0 0
      %392 = vmatprep.subr.bf16.mxu0 0
      %393 = vmatpush2.bf16.msra.mxu0 0
      %394 = vmatprep.subr.bf16.mxu0 0
      %395 = vmatpush2.bf16.msra.mxu0 0
      %396 = vmatprep.subr.bf16.mxu0 0
      %397 = vmatpush2.bf16.msra.mxu0 0
      %398 = vmatprep.subr.bf16.mxu0 0
      %399 = vmatpush2.bf16.msra.mxu0 0
      %400 = vmatprep.subr.bf16.mxu0 0
      %401 = vmatpush2.bf16.msra.mxu0 0
      %402 = vmatprep.subr.bf16.mxu0 0
      %403 = vmatpush2.bf16.msra.mxu0 0
      %404 = vmatprep.subr.bf16.mxu0 0
      %405 = vmatpush2.bf16.msra.mxu0 0
      %406 = vmatprep.mubr.bf16.mxu0 0
      %407 = vmatmul.mubr.bf16.gmra.mxu0 %v309
      %v408 = vpop.f32.mrf.mxu0
      %v409 = vadd.f32 0.0, %v408
      %v410 = vpop.f32.mrf.mxu0
      %v411 = vpop.f32.mrf.mxu0
      %v412 = vpop.f32.mrf.mxu0
      %413 = vdwg.mxu0
      %414 = vst [vmem:[#allocation18] sm:$0xff] %v409
      %v415 = vpack.c.bf16 %v409, %v409
      %v416 = vld [vmem:[#allocation11] sm:$0xf]
      %v417 = vld [vmem:[#allocation11 + $0x4] sm:$0xf]
      %v418 = vld [vmem:[#allocation11 + $0x8] sm:$0xf]
      %v419 = vld [vmem:[#allocation11 + $0xc] sm:$0xf]
      %v420 = vld [vmem:[#allocation11 + $0x10] sm:$0xf]
      %v421 = vld [vmem:[#allocation11 + $0x14] sm:$0xf]
      %v422 = vld [vmem:[#allocation11 + $0x18] sm:$0xf]
      %v423 = vld [vmem:[#allocation11 + $0x1c] sm:$0xf]
      %v424 = vld [vmem:[#allocation11 + $0x20] sm:$0xf]
      %v425 = vld [vmem:[#allocation11 + $0x24] sm:$0xf]
      %v426 = vld [vmem:[#allocation11 + $0x28] sm:$0xf]
      %v427 = vld [vmem:[#allocation11 + $0x2c] sm:$0xf]
      %v428 = vld [vmem:[#allocation11 + $0x30] sm:$0xf]
      %v429 = vld [vmem:[#allocation11 + $0x34] sm:$0xf]
      %v430 = vld [vmem:[#allocation11 + $0x38] sm:$0xf]
      %v431 = vld [vmem:[#allocation11 + $0x3c] sm:$0xf]
      %v448 = vunpack.c.l.b16 %v416
      %v449 = vunpack.c.l.b16 %v417
      %v450 = vunpack.c.l.b16 %v418
      %v451 = vunpack.c.l.b16 %v419
      %v452 = vunpack.c.l.b16 %v420
      %v453 = vunpack.c.l.b16 %v421
      %v454 = vunpack.c.l.b16 %v422
      %v455 = vunpack.c.l.b16 %v423
      %v456 = vunpack.c.l.b16 %v424
      %v457 = vunpack.c.l.b16 %v425
      %v458 = vunpack.c.l.b16 %v426
      %v459 = vunpack.c.l.b16 %v427
      %v460 = vunpack.c.l.b16 %v428
      %v461 = vunpack.c.l.b16 %v429
      %v462 = vunpack.c.l.b16 %v430
      %v463 = vunpack.c.l.b16 %v431
      %v464 = vpack.c.b16 %v449, %v448
      %v465 = vpack.c.b16 %v451, %v450
      %v466 = vpack.c.b16 %v453, %v452
      %v467 = vpack.c.b16 %v455, %v454
      %v468 = vpack.c.b16 %v457, %v456
      %v469 = vpack.c.b16 %v459, %v458
      %v470 = vpack.c.b16 %v461, %v460
      %v471 = vpack.c.b16 %v463, %v462
      %480 = vmatprep.subr.bf16.mxu0 0
      %481 = vmatpush1.bf16.msra.mxu0 %v471
      %482 = vmatprep.subr.bf16.mxu0 0
      %483 = vmatpush1.bf16.msra.mxu0 %v470
      %484 = vmatprep.subr.bf16.mxu0 0
      %485 = vmatpush1.bf16.msra.mxu0 %v469
      %486 = vmatprep.subr.bf16.mxu0 0
      %487 = vmatpush1.bf16.msra.mxu0 %v468
      %488 = vmatprep.subr.bf16.mxu0 0
      %489 = vmatpush1.bf16.msra.mxu0 %v467
      %490 = vmatprep.subr.bf16.mxu0 0
      %491 = vmatpush1.bf16.msra.mxu0 %v466
      %492 = vmatprep.subr.bf16.mxu0 0
      %493 = vmatpush1.bf16.msra.mxu0 %v465
      %494 = vmatprep.subr.bf16.mxu0 0
      %495 = vmatpush1.bf16.msra.mxu0 %v464
      %496 = vmatprep.subr.bf16.mxu0 0
      %497 = vmatpush2.bf16.msra.mxu0 0
      %498 = vmatprep.subr.bf16.mxu0 0
      %499 = vmatpush2.bf16.msra.mxu0 0
      %500 = vmatprep.subr.bf16.mxu0 0
      %501 = vmatpush2.bf16.msra.mxu0 0
      %502 = vmatprep.subr.bf16.mxu0 0
      %503 = vmatpush2.bf16.msra.mxu0 0
      %504 = vmatprep.subr.bf16.mxu0 0
      %505 = vmatpush2.bf16.msra.mxu0 0
      %506 = vmatprep.subr.bf16.mxu0 0
      %507 = vmatpush2.bf16.msra.mxu0 0
      %508 = vmatprep.subr.bf16.mxu0 0
      %509 = vmatpush2.bf16.msra.mxu0 0
      %510 = vmatprep.subr.bf16.mxu0 0
      %511 = vmatpush2.bf16.msra.mxu0 0
      %512 = vmatprep.mubr.bf16.mxu0 0
      %513 = vmatmul.mubr.bf16.gmra.mxu0 %v415
      %v514 = vpop.f32.mrf.mxu0
      %v515 = vadd.f32 0.0, %v514
      %v516 = vpop.f32.mrf.mxu0
      %v517 = vpop.f32.mrf.mxu0
      %v518 = vpop.f32.mrf.mxu0
      %519 = vdwg.mxu0
      %v520 = vadd.f32 %v185, %v515
      %v521 = vpack.c.bf16 %v520, %v520
      %522 = vst [vmem:[#allocation2] sm:$0xf] %v521
    $region57: #{tpu_custom_call.1} parent=1 // pred_fallthru
      _
    %v523 = vld [vmem:[#allocation2] sm:$0xf]
    %v524 = vld [vmem:[#allocation12] sm:$0xf]
    %v525 = vld [vmem:[#allocation12 + $0x4] sm:$0xf]
    %v526 = vld [vmem:[#allocation12 + $0x8] sm:$0xf]
    %v527 = vld [vmem:[#allocation12 + $0xc] sm:$0xf]
    %v528 = vld [vmem:[#allocation12 + $0x10] sm:$0xf]
    %v529 = vld [vmem:[#allocation12 + $0x14] sm:$0xf]
    %v530 = vld [vmem:[#allocation12 + $0x18] sm:$0xf]
    %v531 = vld [vmem:[#allocation12 + $0x1c] sm:$0xf]
    %v532 = vld [vmem:[#allocation12 + $0x20] sm:$0xf]
    %v533 = vld [vmem:[#allocation12 + $0x24] sm:$0xf]
    %v534 = vld [vmem:[#allocation12 + $0x28] sm:$0xf]
    %v535 = vld [vmem:[#allocation12 + $0x2c] sm:$0xf]
    %v536 = vld [vmem:[#allocation12 + $0x30] sm:$0xf]
    %v537 = vld [vmem:[#allocation12 + $0x34] sm:$0xf]
    %v538 = vld [vmem:[#allocation12 + $0x38] sm:$0xf]
    %v539 = vld [vmem:[#allocation12 + $0x3c] sm:$0xf]
    %v540 = vld [vmem:[%s6] sm:$0x1]
    %v542 = vlaneseq
    %v543 = vshrl.u32 %v542, 7
    %v544 = vsub.s32 0, %v543
    %v545 = vrot.slane %v540, %v544
    %v563 = vunpack.c.l.b16 %v524
    %v564 = vunpack.c.l.b16 %v525
    %v565 = vunpack.c.l.b16 %v526
    %v566 = vunpack.c.l.b16 %v527
    %v567 = vunpack.c.l.b16 %v528
    %v568 = vunpack.c.l.b16 %v529
    %v569 = vunpack.c.l.b16 %v530
    %v570 = vunpack.c.l.b16 %v531
    %v571 = vunpack.c.l.b16 %v532
    %v572 = vunpack.c.l.b16 %v533
    %v573 = vunpack.c.l.b16 %v534
    %v574 = vunpack.c.l.b16 %v535
    %v575 = vunpack.c.l.b16 %v536
    %v576 = vunpack.c.l.b16 %v537
    %v577 = vunpack.c.l.b16 %v538
    %v578 = vunpack.c.l.b16 %v539
    %v579 = vpack.c.b16 %v564, %v563
    %v580 = vpack.c.b16 %v566, %v565
    %v581 = vpack.c.b16 %v568, %v567
    %v582 = vpack.c.b16 %v570, %v569
    %v583 = vpack.c.b16 %v572, %v571
    %v584 = vpack.c.b16 %v574, %v573
    %v585 = vpack.c.b16 %v576, %v575
    %v586 = vpack.c.b16 %v578, %v577
    %595 = vmatprep.subr.bf16.mxu0 0
    %596 = vmatpush1.bf16.msra.mxu0 %v586
    %597 = vmatprep.subr.bf16.mxu0 0
    %598 = vmatpush1.bf16.msra.mxu0 %v585
    %599 = vmatprep.subr.bf16.mxu0 0
    %600 = vmatpush1.bf16.msra.mxu0 %v584
    %601 = vmatprep.subr.bf16.mxu0 0
    %602 = vmatpush1.bf16.msra.mxu0 %v583
    %603 = vmatprep.subr.bf16.mxu0 0
    %604 = vmatpush1.bf16.msra.mxu0 %v582
    %605 = vmatprep.subr.bf16.mxu0 0
    %606 = vmatpush1.bf16.msra.mxu0 %v581
    %607 = vmatprep.subr.bf16.mxu0 0
    %608 = vmatpush1.bf16.msra.mxu0 %v580
    %609 = vmatprep.subr.bf16.mxu0 0
    %610 = vmatpush1.bf16.msra.mxu0 %v579
    %611 = vmatprep.subr.bf16.mxu0 0
    %612 = vmatpush2.bf16.msra.mxu0 0
    %613 = vmatprep.subr.bf16.mxu0 0
    %614 = vmatpush2.bf16.msra.mxu0 0
    %615 = vmatprep.subr.bf16.mxu0 0
    %616 = vmatpush2.bf16.msra.mxu0 0
    %617 = vmatprep.subr.bf16.mxu0 0
    %618 = vmatpush2.bf16.msra.mxu0 0
    %619 = vmatprep.subr.bf16.mxu0 0
    %620 = vmatpush2.bf16.msra.mxu0 0
    %621 = vmatprep.subr.bf16.mxu0 0
    %622 = vmatpush2.bf16.msra.mxu0 0
    %623 = vmatprep.subr.bf16.mxu0 0
    %624 = vmatpush2.bf16.msra.mxu0 0
    %625 = vmatprep.subr.bf16.mxu0 0
    %626 = vmatpush2.bf16.msra.mxu0 0
    %627 = vmatprep.mubr.bf16.mxu0 0
    %628 = vmatmul.mubr.bf16.gmra.mxu0 %v523
    %v629 = vpop.f32.mrf.mxu0
    %v630 = vadd.f32 %v545, %v629
    %v631 = vpop.f32.mrf.mxu0
    %v632 = vpop.f32.mrf.mxu0
    %v633 = vpop.f32.mrf.mxu0
    %634 = vdwg.mxu0
    %635 = vst [vmem:[#allocation14] sm:$0xff] %v630
    // Predicated region
    $region58: #{tpu_custom_call.1} parent=1 // pred_check
      _
    $region59: #{tpu_custom_call.1} parent=1 // pred_check_branch
      %637 = sbr.rel (0) target = $region61
    $region60: #{tpu_custom_call.1} parent=1 // pred_region
      %s639 = ssub.s32 128, 128
      %640 = vsyncadd [#allocation5], %s639
      %s642 = sshll.u32 [#allocation14], 4
      %s643 = int_to_ptr.vmem [resolvable:$true] %s642
      %645 = dma.vmem_to_hbm [thread:$0]  %s643, 128, %s7, [#allocation5]
    $region61: #{tpu_custom_call.1} parent=1 // pred_fallthru
      _
    // Predicated region
    $region62: #{tpu_custom_call.1} parent=1 // pred_check
      _
    $region63: #{tpu_custom_call.1} parent=1 // pred_check_branch
      %647 = sbr.rel (0) target = $region65
    $region64: #{tpu_custom_call.1} parent=1 // pred_region
      %s649 = ssub.s32 128, 128
      %650 = vsyncadd [#allocation16], %s649
      %s652 = sshll.u32 [#allocation15], 4
      %s653 = int_to_ptr.vmem [resolvable:$true] %s652
      %655 = dma.vmem_to_hbm [thread:$0]  %s653, 128, %s8, [#allocation16]
    $region65: #{tpu_custom_call.1} parent=1 // pred_fallthru
      _
    // Predicated region
    $region66: #{tpu_custom_call.1} parent=1 // pred_check
      _
    $region67: #{tpu_custom_call.1} parent=1 // pred_check_branch
      %657 = sbr.rel (0) target = $region69
    $region68: #{tpu_custom_call.1} parent=1 // pred_region
      %s659 = ssub.s32 128, 128
      %660 = vsyncadd [#allocation16], %s659
      %s662 = sshll.u32 [#allocation17], 4
      %s663 = int_to_ptr.vmem [resolvable:$true] %s662
      %665 = dma.vmem_to_hbm [thread:$0]  %s663, 128, %s9, [#allocation16]
    $region69: #{tpu_custom_call.1} parent=1 // pred_fallthru
      _
    // Predicated region
    $region70: #{tpu_custom_call.1} parent=1 // pred_check
      _
    $region71: #{tpu_custom_call.1} parent=1 // pred_check_branch
      %667 = sbr.rel (0) target = $region73
    $region72: #{tpu_custom_call.1} parent=1 // pred_region
      %s669 = ssub.s32 128, 128
      %670 = vsyncadd [#allocation19], %s669
      %s672 = sshll.u32 [#allocation18], 4
      %s673 = int_to_ptr.vmem [resolvable:$true] %s672
      %675 = dma.vmem_to_hbm [thread:$0]  %s673, 128, %s10, [#allocation19]
    $region73: #{tpu_custom_call.1} parent=1 // pred_fallthru
      _
    // Predicated region
    $region74: #{tpu_custom_call.1} parent=1 // pred_check
      _
    $region75: #{tpu_custom_call.1} parent=1 // pred_check_branch
      %677 = sbr.rel (0) target = $region77
    $region76: #{tpu_custom_call.1} parent=1 // pred_region
      %678 = dma.done [#allocation5], 128
    $region77: #{tpu_custom_call.1} parent=1 // pred_fallthru
      _
    // Predicated region
    $region78: #{tpu_custom_call.1} parent=1 // pred_check
      _
    $region79: #{tpu_custom_call.1} parent=1 // pred_check_branch
      %680 = sbr.rel (0) target = $region81
    $region80: #{tpu_custom_call.1} parent=1 // pred_region
      %681 = dma.done [#allocation16], 128
    $region81: #{tpu_custom_call.1} parent=1 // pred_fallthru
      _
    // Predicated region
    $region82: #{tpu_custom_call.1} parent=1 // pred_check
      _
    $region83: #{tpu_custom_call.1} parent=1 // pred_check_branch
      %683 = sbr.rel (0) target = $region85
    $region84: #{tpu_custom_call.1} parent=1 // pred_region
      %684 = dma.done [#allocation16], 128
    $region85: #{tpu_custom_call.1} parent=1 // pred_fallthru
      _
    // Predicated region
    $region86: #{tpu_custom_call.1} parent=1 // pred_check
      _
    $region87: #{tpu_custom_call.1} parent=1 // pred_check_branch
      %686 = sbr.rel (0) target = $region89
    $region88: #{tpu_custom_call.1} parent=1 // pred_region
      %687 = dma.done [#allocation19], 128
    $region89: #{tpu_custom_call.1} parent=1 // pred_fallthru
      _
    %688 = vsyncpa [#allocation4], 1
    %689 = vsyncpa [#allocation7], 1
    %690 = vsyncpa [#allocation10], 1
    %691 = vsyncpa [#allocation13], 1
    %692 = vsyncpa [#allocation5], 1
    %693 = vsyncpa [#allocation16], 1
    %694 = vsyncpa [#allocation19], 1

</llo_original>
